<compile_context>
chip_gen: v6e
topology: v6e:2x2x1
jax: 0.10.0
libtpu: 0.0.40
codegen_flags: <defaults>
</compile_context>

<pallas_src>
import functools

import jax
import jax.numpy as jnp
from jax.experimental import pallas as pl
from jax.experimental.pallas import tpu as pltpu

EPS = 1e-5  # BatchNorm2d default eps


def _shift(a, k, mask):
    """y[:, q] = a[:, q - k] (zero fill below k), then zero where mask is True."""
    t = a.shape[1]
    shifted = jnp.concatenate(
        [jnp.zeros((a.shape[0], k), a.dtype), a[:, :t - k]], axis=1)
    return jnp.where(mask, jnp.zeros((), a.dtype), shifted)


def _conv_pool(wout, x_ref, w_ref, b_ref):
    """Rebuild the 9 stride-2 conv taps from the parity planes; conv + maxpool.

    x_ref block: (1, 4*Cin, T) bf16, rows = [ee | eo | oe | oo] x Cin, lanes =
    flattened output pixels q = r*Wo + wo of one image.
    Returns conv (13, T) f32 and pool (Cin, T) f32.
    """
    s2d = x_ref[0]                                    # (4*Cin, T) bf16
    cin = s2d.shape[0] // 4
    t = s2d.shape[1]
    ee = s2d[0 * cin:1 * cin]                         # x[c, 2r,   2wo  ]
    eo = s2d[1 * cin:2 * cin]                         # x[c, 2r,   2wo+1]
    oe = s2d[2 * cin:3 * cin]                         # x[c, 2r+1, 2wo  ]
    oo = s2d[3 * cin:4 * cin]                         # x[c, 2r+1, 2wo+1]

    lane = jax.lax.broadcasted_iota(jnp.int32, (1, t), 1)
    top = lane < wout                                 # r == 0  -> needs input row -1 (pad)
    left = (lane % wout) == 0                         # wo == 0 -> needs input col -1 (pad)

    # patch rows ordered (kh, kw) tap-major / channel-minor to match W2.
    patch = jnp.concatenate([
        _shift(oo, wout + 1, top | left),             # (0,0): x[2r-1, 2wo-1]
        _shift(oe, wout, top),                        # (0,1): x[2r-1, 2wo  ]
        _shift(oo, wout, top),                        # (0,2): x[2r-1, 2wo+1]
        _shift(eo, 1, left),                          # (1,0): x[2r,   2wo-1]
        ee,                                           # (1,1): x[2r,   2wo  ]
        eo,                                           # (1,2): x[2r,   2wo+1]
        _shift(oo, 1, left),                          # (2,0): x[2r+1, 2wo-1]
        oe,                                           # (2,1): x[2r+1, 2wo  ]
        oo,                                           # (2,2): x[2r+1, 2wo+1]
    ], axis=0)                                        # (9*Cin, T) bf16

    conv = jnp.dot(w_ref[...], patch,
                   preferred_element_type=jnp.float32) + b_ref[...]   # (13, T)
    # 2x2 maxpool = max over the four parity planes; only the small result is
    # cast to f32 (no full-tile f32 temporary).
    pool = jnp.maximum(jnp.maximum(ee, eo),
                       jnp.maximum(oe, oo)).astype(jnp.float32)       # (Cin, T)
    return conv, pool


def _stats_kernel(wout, x_ref, w_ref, b_ref, stat_ref):
    """Phase 1: per-image, per-channel [sum, sum of squares] (BatchNorm stats)."""
    conv, pool = _conv_pool(wout, x_ref, w_ref, b_ref)
    s = jnp.concatenate([conv, pool], axis=0)         # (16, T) f32
    stat_ref[0] = jnp.concatenate(
        [jnp.sum(s, axis=1, keepdims=True),
         jnp.sum(s * s, axis=1, keepdims=True)], axis=1)              # (16, 2)


def _norm_kernel(wout, x_ref, w_ref, b_ref, scale_ref, shift_ref, alpha_ref,
                 o_ref):
    """Phase 2: recompute conv/pool, apply folded BN scale/shift + PReLU."""
    conv, pool = _conv_pool(wout, x_ref, w_ref, b_ref)
    y = jnp.concatenate([conv, pool], axis=0)         # (16, T) f32
    y = y * scale_ref[...] + shift_ref[...]
    y = jnp.where(y >= 0, y, alpha_ref[...] * y)
    o_ref[0] = y                                      # one aligned (16, T) store


def first_block(x, w, b, gamma, beta, alpha):
    """x: (N, Cin, H, W) f32 NCHW.  Returns (N, 16, H//2, W//2) f32 NCHW."""
    N, Cin, H, W = x.shape
    assert H % 2 == 0 and W % 2 == 0, "FirstBlock requires even H and W"
    Cconv = w.shape[0]            # 16 - Cin (= 13 for Cin = 3)
    C = Cconv + Cin               # 16
    Ho, Wo = H // 2, W // 2
    T = Ho * Wo
    n_px = N * T

    # Single fused XLA pass over x: bf16 cast + space-to-depth.
    # Rows: parity-group-major [ee | eo | oe | oo], channel-minor.
    # Lanes: flattened per-image output pixel q = r*Wo + wo.
    xs2d = (x.reshape(N, Cin, Ho, 2, Wo, 2)
             .transpose(0, 3, 5, 1, 2, 4)
             .reshape(N, 4 * Cin, T)
             .astype(jnp.bfloat16))

    W2 = w.transpose(0, 2, 3, 1).reshape(Cconv, 9 * Cin).astype(jnp.bfloat16)
    b2 = b.reshape(Cconv, 1).astype(jnp.float32)

    x_spec = pl.BlockSpec((1, 4 * Cin, T), lambda n: (n, 0, 0))
    w_spec = pl.BlockSpec((Cconv, 9 * Cin), lambda n: (0, 0))
    b_spec = pl.BlockSpec((Cconv, 1), lambda n: (0, 0))
    c1_spec = pl.BlockSpec((C, 1), lambda n: (0, 0))
    # Whole-image tiles; comfortably under v7x's 64 MiB physical VMEM.
    vmem_limit = 48 * 1024 * 1024

    # Phase 1: per-image partial statistics, fully parallel across the grid.
    stats = pl.pallas_call(
        functools.partial(_stats_kernel, Wo),
        out_shape=jax.ShapeDtypeStruct((N, C, 2), jnp.float32),
        grid=(N,),
        in_specs=[x_spec, w_spec, b_spec],
        out_specs=pl.BlockSpec((1, C, 2), lambda n: (n, 0, 0)),
        compiler_params=pltpu.CompilerParams(
            dimension_semantics=("parallel",),
            vmem_limit_bytes=vmem_limit),
    )(xs2d, W2, b2)

    # Fold BatchNorm (batch statistics) into one scale/shift per channel.
    tot = jnp.sum(stats, axis=0)                      # (16, 2) f32
    mean = tot[:, 0] / n_px
    var = jnp.maximum(tot[:, 1] / n_px - mean * mean, 0.0)
    scale = gamma * jax.lax.rsqrt(var + EPS)
    shift = beta - mean * scale
    scale2 = scale.reshape(C, 1).astype(jnp.float32)
    shift2 = shift.reshape(C, 1).astype(jnp.float32)
    alpha2 = alpha.reshape(C, 1).astype(jnp.float32)

    # Phase 2: recompute conv/pool per image, normalize + PReLU, store NCHW.
    out = pl.pallas_call(
        functools.partial(_norm_kernel, Wo),
        out_shape=jax.ShapeDtypeStruct((N, C, T), jnp.float32),
        grid=(N,),
        in_specs=[x_spec, w_spec, b_spec, c1_spec, c1_spec, c1_spec],
        out_specs=pl.BlockSpec((1, C, T), lambda n: (n, 0, 0)),
        compiler_params=pltpu.CompilerParams(
            dimension_semantics=("parallel",),
            vmem_limit_bytes=vmem_limit),
    )(xs2d, W2, b2, scale2, shift2, alpha2)

    return out.reshape(N, C, Ho, Wo)                  # free: already NCHW order


def reference(x, w, b, gamma, beta, alpha):
    """Pure-JAX reference matching the PyTorch forward (training mode)."""
    conv = jax.lax.conv_general_dilated(
        x, w, window_strides=(2, 2), padding=((1, 1), (1, 1)),
        dimension_numbers=("NCHW", "OIHW", "NCHW"),
        precision=jax.lax.Precision.HIGHEST)
    conv = conv + b[None, :, None, None]
    pool = jax.lax.reduce_window(x, -jnp.inf, jax.lax.max,
                                 (1, 1, 2, 2), (1, 1, 2, 2), "VALID")
    y = jnp.concatenate([conv, pool], axis=1)
    mean = y.mean(axis=(0, 2, 3), keepdims=True)
    var = ((y - mean) ** 2).mean(axis=(0, 2, 3), keepdims=True)
    y = (y - mean) * jax.lax.rsqrt(var + EPS)
    y = y * gamma[None, :, None, None] + beta[None, :, None, None]
    return jnp.where(y >= 0, y, alpha[None, :, None, None] * y)


if __name__ == "__main__":
    key = jax.random.PRNGKey(0)
    kx, kw, kb = jax.random.split(key, 3)

    N, Cin, H, W = 2, 3, 16, 16
    Cconv, C = 16 - Cin, 16

    x = jax.random.normal(kx, (N, Cin, H, W), jnp.float32)
    w = jax.random.normal(kw, (Cconv, Cin, 3, 3), jnp.float32) * 0.1
    b = jax.random.normal(kb, (Cconv,), jnp.float32) * 0.01
    gamma = jnp.ones((C,), jnp.float32)          # BatchNorm2d default weight
    beta = jnp.zeros((C,), jnp.float32)          # BatchNorm2d default bias
    alpha = jnp.full((C,), 0.25, jnp.float32)    # PReLU default slope

    out = jax.block_until_ready(first_block(x, w, b, gamma, beta, alpha))
    ref = reference(x, w, b, gamma, beta, alpha)

    assert out.shape == (N, C, H // 2, W // 2), out.shape
    # tolerance accounts for the bf16 input path (f32 accumulation everywhere)
    assert jnp.allclose(out, ref, atol=2e-2, rtol=2e-2), \
        float(jnp.max(jnp.abs(out - ref)))
    print("KERNEL_OK")
</pallas_src>

<mosaic_0001>
module attributes {stable_mosaic.version = 11 : i64} {
  func.func @_stats_kernel(%arg0: i32, %arg1: memref<1x12x64xbf16, #tpu.memory_space<vmem>>, %arg2: memref<13x27xbf16, #tpu.memory_space<vmem>>, %arg3: memref<13x1xf32, #tpu.memory_space<vmem>>, %arg4: memref<1x16x2xf32, #tpu.memory_space<vmem>>) attributes {dimension_semantics = [#tpu.dimension_semantics<parallel>], iteration_bounds = array<i64: 2>, scalar_prefetch = 0 : i64, scratch_operands = 0 : i64, tpu.core_type = #tpu.core_type<tc>, window_params = [{transform_indices = @transform_0, window_bounds = array<i64: 1, 12, 64>}, {pipeline_mode = #tpu.pipeline_mode<synchronous>, transform_indices = @transform_1, window_bounds = array<i64: 13, 27>}, {pipeline_mode = #tpu.pipeline_mode<synchronous>, transform_indices = @transform_2, window_bounds = array<i64: 13, 1>}, {transform_indices = @transform_3, window_bounds = array<i64: 1, 16, 2>}]} {
    %c0 = arith.constant 0 : index
    %c0_0 = arith.constant 0 : index
    %c0_1 = arith.constant 0 : index
    %0 = vector.load %arg1[%c0, %c0_0, %c0_1] : memref<1x12x64xbf16, #tpu.memory_space<vmem>>, vector<1x12x64xbf16>
    %1 = vector.shape_cast %0 : vector<1x12x64xbf16> to vector<12x64xbf16>
    %2 = vector.extract_strided_slice %1 {offsets = [0, 0], sizes = [3, 64], strides = [1, 1]} : vector<12x64xbf16> to vector<3x64xbf16>
    %3 = vector.extract_strided_slice %1 {offsets = [3, 0], sizes = [3, 64], strides = [1, 1]} : vector<12x64xbf16> to vector<3x64xbf16>
    %4 = vector.extract_strided_slice %1 {offsets = [6, 0], sizes = [3, 64], strides = [1, 1]} : vector<12x64xbf16> to vector<3x64xbf16>
    %5 = vector.extract_strided_slice %1 {offsets = [9, 0], sizes = [3, 64], strides = [1, 1]} : vector<12x64xbf16> to vector<3x64xbf16>
    %6 = tpu.iota {dimensions = array<i32: 1>} : vector<1x64xi32>
    %c8_i32 = arith.constant 8 : i32
    %7 = vector.broadcast %c8_i32 : i32 to vector<1x64xi32>
    %8 = arith.cmpi slt, %6, %7 : vector<1x64xi32>
    %c8_i32_2 = arith.constant 8 : i32
    %c0_i32 = arith.constant 0 : i32
    %9 = arith.cmpi eq, %c8_i32_2, %c0_i32 : i32
    %c1_i32 = arith.constant 1 : i32
    %10 = arith.select %9, %c1_i32, %c8_i32_2 : i32
    %11 = vector.broadcast %10 : i32 to vector<1x64xi32>
    %12 = arith.remsi %6, %11 : vector<1x64xi32>
    %c0_i32_3 = arith.constant 0 : i32
    %13 = vector.broadcast %c0_i32_3 : i32 to vector<1x64xi32>
    %14 = arith.cmpi ne, %12, %13 : vector<1x64xi32>
    %c0_i32_4 = arith.constant 0 : i32
    %15 = vector.broadcast %c0_i32_4 : i32 to vector<1x64xi32>
    %16 = arith.cmpi slt, %12, %15 : vector<1x64xi32>
    %c0_i32_5 = arith.constant 0 : i32
    %17 = arith.cmpi slt, %10, %c0_i32_5 : i32
    %18 = vector.broadcast %17 : i1 to vector<1x64xi1>
    %19 = vector.broadcast %18 : vector<1x64xi1> to vector<1x64xi1>
    %20 = arith.xori %16, %19 : vector<1x64xi1>
    %21 = arith.andi %20, %14 : vector<1x64xi1>
    %22 = vector.broadcast %10 : i32 to vector<1x64xi32>
    %23 = arith.addi %12, %22 : vector<1x64xi32>
    %24 = arith.select %21, %23, %12 : vector<1x64xi1>, vector<1x64xi32>
    %c0_i32_6 = arith.constant 0 : i32
    %25 = vector.broadcast %c0_i32_6 : i32 to vector<1x64xi32>
    %26 = arith.cmpi eq, %24, %25 : vector<1x64xi32>
    %27 = arith.ori %8, %26 : vector<1x64xi1>
    %cst = arith.constant 0.000000e+00 : bf16
    %28 = vector.broadcast %cst : bf16 to vector<3x9xbf16>
    %29 = vector.extract_strided_slice %5 {offsets = [0, 0], sizes = [3, 55], strides = [1, 1]} : vector<3x64xbf16> to vector<3x55xbf16>
    %30 = tpu.concatenate %28, %29 in 1 : vector<3x9xbf16>, vector<3x55xbf16> -> vector<3x64xbf16>
    %cst_7 = arith.constant 0.000000e+00 : bf16
    %31 = vector.shape_cast %27 : vector<1x64xi1> to vector<1x64xi1>
    %32 = vector.broadcast %31 : vector<1x64xi1> to vector<3x64xi1>
    %33 = vector.broadcast %cst_7 : bf16 to vector<3x64xbf16>
    %34 = arith.select %32, %33, %30 : vector<3x64xi1>, vector<3x64xbf16>
    %cst_8 = arith.constant 0.000000e+00 : bf16
    %35 = vector.broadcast %cst_8 : bf16 to vector<3x8xbf16>
    %36 = vector.extract_strided_slice %4 {offsets = [0, 0], sizes = [3, 56], strides = [1, 1]} : vector<3x64xbf16> to vector<3x56xbf16>
    %37 = tpu.concatenate %35, %36 in 1 : vector<3x8xbf16>, vector<3x56xbf16> -> vector<3x64xbf16>
    %cst_9 = arith.constant 0.000000e+00 : bf16
    %38 = vector.shape_cast %8 : vector<1x64xi1> to vector<1x64xi1>
    %39 = vector.broadcast %38 : vector<1x64xi1> to vector<3x64xi1>
    %40 = vector.broadcast %cst_9 : bf16 to vector<3x64xbf16>
    %41 = arith.select %39, %40, %37 : vector<3x64xi1>, vector<3x64xbf16>
    %cst_10 = arith.constant 0.000000e+00 : bf16
    %42 = vector.broadcast %cst_10 : bf16 to vector<3x8xbf16>
    %43 = vector.extract_strided_slice %5 {offsets = [0, 0], sizes = [3, 56], strides = [1, 1]} : vector<3x64xbf16> to vector<3x56xbf16>
    %44 = tpu.concatenate %42, %43 in 1 : vector<3x8xbf16>, vector<3x56xbf16> -> vector<3x64xbf16>
    %cst_11 = arith.constant 0.000000e+00 : bf16
    %45 = vector.shape_cast %8 : vector<1x64xi1> to vector<1x64xi1>
    %46 = vector.broadcast %45 : vector<1x64xi1> to vector<3x64xi1>
    %47 = vector.broadcast %cst_11 : bf16 to vector<3x64xbf16>
    %48 = arith.select %46, %47, %44 : vector<3x64xi1>, vector<3x64xbf16>
    %cst_12 = arith.constant 0.000000e+00 : bf16
    %49 = vector.broadcast %cst_12 : bf16 to vector<3x1xbf16>
    %50 = vector.extract_strided_slice %3 {offsets = [0, 0], sizes = [3, 63], strides = [1, 1]} : vector<3x64xbf16> to vector<3x63xbf16>
    %51 = tpu.concatenate %49, %50 in 1 : vector<3x1xbf16>, vector<3x63xbf16> -> vector<3x64xbf16>
    %cst_13 = arith.constant 0.000000e+00 : bf16
    %52 = vector.shape_cast %26 : vector<1x64xi1> to vector<1x64xi1>
    %53 = vector.broadcast %52 : vector<1x64xi1> to vector<3x64xi1>
    %54 = vector.broadcast %cst_13 : bf16 to vector<3x64xbf16>
    %55 = arith.select %53, %54, %51 : vector<3x64xi1>, vector<3x64xbf16>
    %cst_14 = arith.constant 0.000000e+00 : bf16
    %56 = vector.broadcast %cst_14 : bf16 to vector<3x1xbf16>
    %57 = vector.extract_strided_slice %5 {offsets = [0, 0], sizes = [3, 63], strides = [1, 1]} : vector<3x64xbf16> to vector<3x63xbf16>
    %58 = tpu.concatenate %56, %57 in 1 : vector<3x1xbf16>, vector<3x63xbf16> -> vector<3x64xbf16>
    %cst_15 = arith.constant 0.000000e+00 : bf16
    %59 = vector.shape_cast %26 : vector<1x64xi1> to vector<1x64xi1>
    %60 = vector.broadcast %59 : vector<1x64xi1> to vector<3x64xi1>
    %61 = vector.broadcast %cst_15 : bf16 to vector<3x64xbf16>
    %62 = arith.select %60, %61, %58 : vector<3x64xi1>, vector<3x64xbf16>
    %63 = tpu.concatenate %34, %41, %48, %55, %2, %3, %62, %4, %5 in 0 : vector<3x64xbf16>, vector<3x64xbf16>, vector<3x64xbf16>, vector<3x64xbf16>, vector<3x64xbf16>, vector<3x64xbf16>, vector<3x64xbf16>, vector<3x64xbf16>, vector<3x64xbf16> -> vector<27x64xbf16>
    %c0_16 = arith.constant 0 : index
    %c0_17 = arith.constant 0 : index
    %64 = vector.load %arg2[%c0_16, %c0_17] : memref<13x27xbf16, #tpu.memory_space<vmem>>, vector<13x27xbf16>
    %cst_18 = arith.constant dense<0.000000e+00> : vector<13x64xf32>
    %65 = tpu.matmul %64, %63, %cst_18 {dimension_numbers = #tpu.dot_dimension_numbers<[1], [0], [0], [1], [0, 0, 1, 1], [], []>} : vector<13x27xbf16>, vector<27x64xbf16>, vector<13x64xf32> -> vector<13x64xf32>
    %c0_19 = arith.constant 0 : index
    %c0_20 = arith.constant 0 : index
    %66 = vector.load %arg3[%c0_19, %c0_20] : memref<13x1xf32, #tpu.memory_space<vmem>>, vector<13x1xf32>
    %67 = vector.broadcast %66 : vector<13x1xf32> to vector<13x64xf32>
    %68 = arith.addf %65, %67 : vector<13x64xf32>
    %69 = arith.maximumf %2, %3 : vector<3x64xbf16>
    %70 = arith.maximumf %4, %5 : vector<3x64xbf16>
    %71 = arith.maximumf %69, %70 : vector<3x64xbf16>
    %72 = arith.extf %71 : vector<3x64xbf16> to vector<3x64xf32>
    %73 = tpu.concatenate %68, %72 in 0 : vector<13x64xf32>, vector<3x64xf32> -> vector<16x64xf32>
    %cst_21 = arith.constant dense<0.000000e+00> : vector<16xf32>
    %74 = vector.multi_reduction <add>, %73, %cst_21 [1] : vector<16x64xf32> to vector<16xf32>
    %75 = vector.shape_cast %74 : vector<16xf32> to vector<16x1xf32>
    %76 = arith.mulf %73, %73 : vector<16x64xf32>
    %cst_22 = arith.constant dense<0.000000e+00> : vector<16xf32>
    %77 = vector.multi_reduction <add>, %76, %cst_22 [1] : vector<16x64xf32> to vector<16xf32>
    %78 = vector.shape_cast %77 : vector<16xf32> to vector<16x1xf32>
    %79 = tpu.concatenate %75, %78 in 1 : vector<16x1xf32>, vector<16x1xf32> -> vector<16x2xf32>
    %c0_23 = arith.constant 0 : index
    %c0_24 = arith.constant 0 : index
    %c0_25 = arith.constant 0 : index
    %80 = vector.load %arg4[%c0_23, %c0_24, %c0_25] : memref<1x16x2xf32, #tpu.memory_space<vmem>>, vector<1x16x2xf32>
    %81 = vector.shape_cast %80 : vector<1x16x2xf32> to vector<16x2xf32>
    %82 = vector.shape_cast %79 : vector<16x2xf32> to vector<1x16x2xf32>
    tpu.vector_store %arg4[%c0_23, %c0_24, %c0_25], %82 {strides = array<i32>} : memref<1x16x2xf32, #tpu.memory_space<vmem>>, vector<1x16x2xf32>,
    return
  }
  func.func @transform_0(%arg0: i32) -> (i32, i32, i32) {
    %c0_i32 = arith.constant 0 : i32
    %c0_i32_0 = arith.constant 0 : i32
    %c0_i32_1 = arith.constant 0 : i32
    return %arg0, %c0_i32, %c0_i32_0 : i32, i32, i32
  }
  func.func @transform_1(%arg0: i32) -> (i32, i32) {
    %c0_i32 = arith.constant 0 : i32
    %c0_i32_0 = arith.constant 0 : i32
    %c0_i32_1 = arith.constant 0 : i32
    return %c0_i32, %c0_i32_0 : i32, i32
  }
  func.func @transform_2(%arg0: i32) -> (i32, i32) {
    %c0_i32 = arith.constant 0 : i32
    %c0_i32_0 = arith.constant 0 : i32
    %c0_i32_1 = arith.constant 0 : i32
    return %c0_i32, %c0_i32_0 : i32, i32
  }
  func.func @transform_3(%arg0: i32) -> (i32, i32, i32) {
    %c0_i32 = arith.constant 0 : i32
    %c0_i32_0 = arith.constant 0 : i32
    %c0_i32_1 = arith.constant 0 : i32
    return %arg0, %c0_i32, %c0_i32_0 : i32, i32, i32
  }
}

</mosaic_0001>

<llo_original>
// kernel: tpu_custom_call.1
$region0: #{tpu_custom_call.1}
  #allocation0 [shape = 'u32[]', space=smem, size = 0x4, offset = 0x4, fixed_abs, tag = 'smem constant byte address 0x4 - core index']
  #allocation1 [shape = 'u32[144,128]{1,0:T(1,128)}', space=vmem, size = 0x12000, scoped, tag = 'internal scratch']
  %s0 = inlined_call_operand.vmem [shape: bf16[2,12,64], index: 0, kind: input, shape index: {}]
  %s1 = inlined_call_operand.vmem [shape: bf16[13,27], index: 1, kind: input, shape index: {}]
  %s2 = inlined_call_operand.vmem [shape: f32[13,1], index: 2, kind: input, shape index: {}]
  %s3 = inlined_call_operand.vmem [shape: f32[2,16,2], index: 3, kind: output, shape index: {}]
  %s4 = sld [smem:[#allocation0]]
  $region45: #{tpu_custom_call.1} parent=0
    _
  %s6 = ssub.s32 1, %s4
  %s7 = scalar_select 0, %s6, %s4
  loop: start=0, step=1, limit=4
  $region2: #{tpu_custom_call.1} parent=0 // loop_pre_header
    _
  $region3: #{tpu_custom_call.1} parent=0 // loop_header
    %s9 = sphi 0, %s13
    %p10 = scmp.ge.s32.totalorder %s9, 4
    %s19 = sphi 0, %s21
    %s22 = sphi 0, %s19
    %s23 = sphi 0, %s22
    %s39 = sphi 0, %s23
    %s43 = sphi 0, %s43
    %s45 = sphi 0, %s43
    %s46 = sphi 0, %s45
    %s60 = sphi 0, %s46
    %s64 = sphi 0, %s64
    %s66 = sphi 0, %s64
    %s67 = sphi 0, %s66
    %s81 = sphi 0, %s67
    %s87 = sphi 0, %s89
    %s90 = sphi 0, %s87
    %s91 = sphi 0, %s90
    %s107 = sphi 0, %s91
  $region4: #{tpu_custom_call.1} parent=0 // loop_header_branch
    %12 = sbr.rel (%p10) target = $region8
  $region5: #{tpu_custom_call.1} parent=0 // loop_body
    %s14 = ssub.s32 %s9, 1
    %s15 = ssub.s32 %s9, 2
    %s16 = sadd.s32 %s9, 1
    %s17 = ssub.s32 %s9, %s16
    %p18 = scmp.eq.s32.totalorder %s17, 0
    %s20 = sadd.s32 %s19, 1
    %s21 = scalar_select %p18, %s19, %s20
    %p24 = pneg %p18
    %p25 = scmp.eq.s32.totalorder %s9, 1
    %p26 = por %p24, %p25
    %p27 = scmp.ne.s32.totalorder %s19, %s22
    %p28 = scmp.eq.s32.totalorder %s9, 0
    %p29 = por %p27, %p28
    %p30 = scmp.ne.s32.totalorder %s19, %s22
    %p31 = scmp.eq.s32.totalorder %s14, 1
    %p32 = por %p30, %p31
    %p33 = scmp.ne.s32.totalorder %s22, %s23
    %p34 = scmp.eq.s32.totalorder %s14, 0
    %p35 = por %p33, %p34
    %p36 = scmp.ne.s32.totalorder %s22, %s23
    %p37 = scmp.eq.s32.totalorder %s15, 1
    %p38 = por %p36, %p37
    %p40 = scmp.ne.s32.totalorder %s23, %s39
    %p41 = scmp.eq.s32.totalorder %s15, 0
    %p42 = por %p40, %p41
    %s44 = sadd.s32 %s43, 1
    %p47 = scmp.eq.s32.totalorder %s9, 1
    %p48 = scmp.ne.s32.totalorder %s43, %s45
    %p49 = scmp.eq.s32.totalorder %s9, 0
    %p50 = por %p48, %p49
    %p51 = scmp.ne.s32.totalorder %s43, %s45
    %p52 = scmp.eq.s32.totalorder %s14, 1
    %p53 = por %p51, %p52
    %p54 = scmp.ne.s32.totalorder %s45, %s46
    %p55 = scmp.eq.s32.totalorder %s14, 0
    %p56 = por %p54, %p55
    %p57 = scmp.ne.s32.totalorder %s45, %s46
    %p58 = scmp.eq.s32.totalorder %s15, 1
    %p59 = por %p57, %p58
    %p61 = scmp.ne.s32.totalorder %s46, %s60
    %p62 = scmp.eq.s32.totalorder %s15, 0
    %p63 = por %p61, %p62
    %s65 = sadd.s32 %s64, 1
    %p68 = scmp.eq.s32.totalorder %s9, 1
    %p69 = scmp.ne.s32.totalorder %s64, %s66
    %p70 = scmp.eq.s32.totalorder %s9, 0
    %p71 = por %p69, %p70
    %p72 = scmp.ne.s32.totalorder %s64, %s66
    %p73 = scmp.eq.s32.totalorder %s14, 1
    %p74 = por %p72, %p73
    %p75 = scmp.ne.s32.totalorder %s66, %s67
    %p76 = scmp.eq.s32.totalorder %s14, 0
    %p77 = por %p75, %p76
    %p78 = scmp.ne.s32.totalorder %s66, %s67
    %p79 = scmp.eq.s32.totalorder %s15, 1
    %p80 = por %p78, %p79
    %p82 = scmp.ne.s32.totalorder %s67, %s81
    %p83 = scmp.eq.s32.totalorder %s15, 0
    %p84 = por %p82, %p83
    %s85 = ssub.s32 %s9, %s16
    %p86 = scmp.eq.s32.totalorder %s85, 0
    %s88 = sadd.s32 %s87, 1
    %s89 = scalar_select %p86, %s87, %s88
    %p92 = pneg %p86
    %p93 = scmp.eq.s32.totalorder %s9, 1
    %p94 = por %p92, %p93
    %p95 = scmp.ne.s32.totalorder %s87, %s90
    %p96 = scmp.eq.s32.totalorder %s9, 0
    %p97 = por %p95, %p96
    %p98 = scmp.ne.s32.totalorder %s87, %s90
    %p99 = scmp.eq.s32.totalorder %s14, 1
    %p100 = por %p98, %p99
    %p101 = scmp.ne.s32.totalorder %s90, %s91
    %p102 = scmp.eq.s32.totalorder %s14, 0
    %p103 = por %p101, %p102
    %p104 = scmp.ne.s32.totalorder %s90, %s91
    %p105 = scmp.eq.s32.totalorder %s15, 1
    %p106 = por %p104, %p105
    %p108 = scmp.ne.s32.totalorder %s91, %s107
    %p109 = scmp.eq.s32.totalorder %s15, 0
    %p110 = por %p108, %p109
    %p111 = scmp.le.s32.totalorder 1, %s9
    %p112 = scmp.lt.s32.totalorder %s9, 3
    %p113 = pnand %p111, %p112
    %p114 = pneg %p113
    // Predicated region
    $region9: #{tpu_custom_call.1} parent=5 // pred_check
      _
    $region10: #{tpu_custom_call.1} parent=5 // pred_check_branch
      %116 = sbr.rel (%p113) target = $region12
    $region11: #{tpu_custom_call.1} parent=5 // pred_region
      %s117 = ssub.s32 %s9, 1
      // Predicated region
      $region13: #{tpu_custom_call.1} parent=11 // pred_check
        %p118 = pneg %p56
      $region14: #{tpu_custom_call.1} parent=11 // pred_check_branch
        %120 = sbr.rel (%p118) target = $region16
      $region15: #{tpu_custom_call.1} parent=11 // pred_region
        _
      $region16: #{tpu_custom_call.1} parent=11 // pred_fallthru
        _
      // Predicated region
      $region17: #{tpu_custom_call.1} parent=11 // pred_check
        %p121 = pneg %p77
      $region18: #{tpu_custom_call.1} parent=11 // pred_check_branch
        %123 = sbr.rel (%p121) target = $region20
      $region19: #{tpu_custom_call.1} parent=11 // pred_region
        _
      $region20: #{tpu_custom_call.1} parent=11 // pred_fallthru
        _
    $region12: #{tpu_custom_call.1} parent=5 // pred_fallthru
      _
    %p124 = scmp.lt.s32.totalorder %s9, 2
    // Predicated region
    $region21: #{tpu_custom_call.1} parent=5 // pred_check
      %p125 = pneg %p124
    $region22: #{tpu_custom_call.1} parent=5 // pred_check_branch
      %127 = sbr.rel (%p125) target = $region24
    $region23: #{tpu_custom_call.1} parent=5 // pred_region
      // Predicated region
      $region25: #{tpu_custom_call.1} parent=23 // pred_check
        %p128 = pneg %p29
      $region26: #{tpu_custom_call.1} parent=23 // pred_check_branch
        %130 = sbr.rel (%p128) target = $region28
      $region27: #{tpu_custom_call.1} parent=23 // pred_region
        %p131 = scmp.lt.s32.totalorder %s9, 1
        %s132 = scalar_select %p131, %s9, 1
        %s133 = smul.addr %s132, 2
        %s134 = smul.addr %s133, 4
        %s135 = scalar_lea.vmem %s0, %s134
      $region28: #{tpu_custom_call.1} parent=23 // pred_fallthru
        _
    $region24: #{tpu_custom_call.1} parent=5 // pred_fallthru
      _
    %p136 = scmp.le.s32.totalorder 1, %s9
    %p137 = scmp.lt.s32.totalorder %s9, 3
    %p138 = pnand %p136, %p137
    %p139 = pneg %p138
    // Predicated region
    $region29: #{tpu_custom_call.1} parent=5 // pred_check
      _
    $region30: #{tpu_custom_call.1} parent=5 // pred_check_branch
      %141 = sbr.rel (%p138) target = $region32
    $region31: #{tpu_custom_call.1} parent=5 // pred_region
      %s142 = ssub.s32 %s9, 1
      %p143 = scmp.lt.s32.totalorder %s14, 1
      %s144 = scalar_select %p143, %s14, 1
      %s145 = smul.addr %s144, 2
      %s146 = smul.addr %s145, 4
      %s147 = scalar_lea.vmem %s0, %s146
      %p148 = pneg %p35
      %p149 = pneg %p32
      %p150 = pneg %p56
      %p151 = pneg %p53
      %p152 = pneg %p77
      %p153 = pneg %p74
      %p154 = pneg %p103
      %p155 = pneg %p100
      %p156 = scmp.lt.s32.totalorder %s14, 1
      %s157 = scalar_select %p156, %s14, 1
      %s158 = smul.addr %s157, 2
      %s159 = smul.addr %s158, 8
      %s160 = scalar_lea.vmem %s3, %s159
      %p161 = scmp.lt.s32.totalorder %s14, 1
      %s162 = scalar_select %p161, %s14, 1
      %s163 = smul.addr %s162, 2
      %s164 = smul.addr %s163, 4
      %s165 = scalar_lea.vmem %s0, %s164
      %p166 = scmp.lt.s32.totalorder %s14, 1
      %s167 = scalar_select %p166, %s14, 1
      %s168 = smul.addr %s167, 2
      %s169 = smul.addr %s168, 8
      %s170 = scalar_lea.vmem %s3, %s169
      %v172 = vld [vmem:[%s165] sm:$0xf]
      %v173 = vld [vmem:[%s165 + $0x4] sm:$0x3]
      %v174 = vlaneseq
      %v175 = vand.u32 %v174, 127
      %vm176 = vcmp.lt.s32.totalorder %v175, 8
      %vm177 = vcmp.lt.s32.totalorder %v175, 0
      %v178 = vsub.s32 0, %v175
      %v179 = vsel %vm177, %v178, %v175
      %v180 = vshrl.u32 %v179, 3
      %v181 = vand.u32 %v179, 7
      %v182 = vsub.s32 0, %v181
      %v183 = vsel %vm177, %v182, %v181
      %vm184 = vcmp.ne.s32.totalorder %v183, 0
      %vm185 = vcmp.lt.s32.totalorder %v183, 0
      %vm186 = vmand %vm185, %vm184
      %v187 = vadd.s32 %v183, 8
      %v188 = vsel %vm186, %v187, %v183
      %vm189 = vcmp.eq.s32.totalorder %v188, 0
      %vm190 = vmor %vm176, %vm189
      %v192 = vunpack.c.l.b16 %v173
      %v193 = vpack.c.b16 %v192, %v192
      %v195 = vshrl.u32 %v193, 16
      %v197 = vshll.u32 %v193, 16
      %v199 = vrot.slane %v197, 1
      %v200 = vor.u32 %v195, %v199
      %201 = vrot.lane.b32.xlu0 %v200, 9
      %v202 = vpop.permute.xlu0 %201
      %vm203 = vcmask 72704
      %v206 = vsel %vm203, 0, %v202
      %v208 = vsel %vm190, 1, 0
      %vm209 = vcmp.eq.s32.totalorder %v208, 1
      %vm210 = vmpackc.low %vm209, %vm209
      %v211 = vsel %vm210, 0, %v206
      %v213 = vunpack.c.l.b16 %v172
      %v214 = vpack.c.b16 %v192, %v213
      %v215 = vrot.slane %v214, 3
      %216 = vrot.lane.b32.xlu0 %v215, 8
      %v217 = vpop.permute.xlu0 %216
      %vm218 = vcmask 64512
      %v220 = vsel %vm218, 0, %v217
      %v222 = vsel %vm176, 1, 0
      %vm223 = vcmp.eq.s32.totalorder %v222, 1
      %vm224 = vmpackc.low %vm223, %vm223
      %v225 = vsel %vm224, 0, %v220
      %226 = vrot.lane.b32.xlu0 %v200, 8
      %v227 = vpop.permute.xlu0 %226
      %v229 = vsel %vm218, 0, %v227
      %v231 = vsel %vm224, 0, %v229
      %v232 = vpack.c.b16 %v213, %v213
      %v234 = vshrl.u32 %v232, 16
      %v236 = vrot.slane %v234, 1
      %v237 = vshll.u32 %v232, 16
      %v239 = vrot.slane %v237, 2
      %v240 = vor.u32 %v236, %v239
      %241 = vrot.lane.b32.xlu0 %v240, 1
      %v242 = vpop.permute.xlu0 %241
      %vm243 = vcmask 7168
      %v245 = vsel %vm243, 0, %v242
      %v247 = vsel %vm189, 1, 0
      %vm248 = vcmp.eq.s32.totalorder %v247, 1
      %vm249 = vmpackc.low %vm248, %vm248
      %v250 = vsel %vm249, 0, %v245
      %251 = vrot.lane.b32.xlu0 %v200, 1
      %v252 = vpop.permute.xlu0 %251
      %v254 = vsel %vm243, 0, %v252
      %v256 = vsel %vm249, 0, %v254
      %v258 = vshrl.u32 %v225, 16
      %v260 = vrot.slane %v258, 6
      %v261 = vshll.u32 %v225, 16
      %v263 = vrot.slane %v261, 7
      %v264 = vor.u32 %v260, %v263
      %v267 = vrot.slane %v231, 5
      %v269 = vshrl.u32 %v250, 16
      %v271 = vrot.slane %v269, 3
      %v272 = vshll.u32 %v250, 16
      %v274 = vrot.slane %v272, 4
      %v275 = vor.u32 %v271, %v274
      %v277 = vrot.slane %v232, 2
      %v280 = vrot.slane %v256, 7
      %v282 = vshrl.u32 %v214, 16
      %v284 = vshll.u32 %v214, 16
      %v286 = vrot.slane %v284, 1
      %v287 = vor.u32 %v282, %v286
      %v289 = vrot.slane %v195, 4
      %v290 = vrot.slane %v197, 5
      %v291 = vor.u32 %v289, %v290
      %vm292 = vcmask 1041408
      %vm293 = vsmask.f32 1280
      %vm294 = vmand %vm292, %vm293
      %v295 = vsel %vm294, %v211, %v264
      %vm296 = vcmask 1042432
      %v299 = vsel %vm296, %v295, %v267
      %vm301 = vcmask 1044480
      %vm302 = vsmask.f32 4352
      %vm303 = vmand %vm301, %vm302
      %v304 = vsel %vm303, %v299, %v275
      %vm305 = vcmask 1045504
      %v308 = vsel %vm305, %v304, %v277
      %vm310 = vcmask 1047552
      %vm311 = vsmask.f32 7424
      %vm312 = vmand %vm310, %vm311
      %v313 = vsel %vm312, %v308, %v277
      %vm314 = vcmask 1040384
      %v316 = vsel %vm314, %v277, %v280
      %vm318 = vcmask 1042432
      %vm319 = vsmask.f32 2304
      %vm320 = vmand %vm318, %vm319
      %v321 = vsel %vm320, %v316, %v287
      %vm322 = vcmask 1043456
      %v325 = vsel %vm322, %v321, %v291
      %v326 = vld [vmem:[%s1] sm:$0xf]
      %v327 = vld [vmem:[%s1 + $0x4] sm:$0x7]
      %v328 = vld [vmem:[%s2] sm:$0xff]
      %v329 = vld [vmem:[%s2 + $0x8] sm:$0x1f]
      %331 = vset.pattern.permute.xlu0 0
      %332 = vperm.xlu0 %331, %v328
      %v333 = vpop.permute.xlu0 %332
      %336 = vset.pattern.permute.xlu0 0
      %337 = vperm.xlu0 %336, %v329
      %v338 = vpop.permute.xlu0 %337
      %v342 = vunpack.c.l.b16 %v326
      %v343 = vunpack.c.l.b16 %v327
      %v344 = vpack.c.b16 %v343, %v342
      %vm345 = vcmask 220160
      %v347 = vsel %vm345, %v344, 0
      %vm349 = vcmask 1044480
      %v350 = vsel %vm349, 4294967295, 65535
      %v351 = vsel %vm305, %v350, 0
      %v352 = vand.u32 %v325, %v351
      %354 = vmatprep.subr.bf16.mxu0 0
      %355 = vmatpush1.bf16.msra.mxu0 0
      %356 = vmatprep.subr.bf16.mxu0 0
      %357 = vmatpush1.bf16.msra.mxu0 0
      %358 = vmatprep.subr.bf16.mxu0 0
      %359 = vmatpush1.bf16.msra.mxu0 0
      %360 = vmatprep.subr.bf16.mxu0 0
      %361 = vmatpush1.bf16.msra.mxu0 0
      %362 = vmatprep.subr.bf16.mxu0 0
      %363 = vmatpush1.bf16.msra.mxu0 0
      %364 = vmatprep.subr.bf16.mxu0 0
      %365 = vmatpush1.bf16.msra.mxu0 0
      %366 = vmatprep.subr.bf16.mxu0 0
      %367 = vmatpush1.bf16.msra.mxu0 %v352
      %368 = vmatprep.subr.bf16.mxu0 0
      %369 = vmatpush1.bf16.msra.mxu0 %v313
      %370 = vmatprep.subr.bf16.mxu0 0
      %371 = vmatpush2.bf16.msra.mxu0 0
      %372 = vmatprep.subr.bf16.mxu0 0
      %373 = vmatpush2.bf16.msra.mxu0 0
      %374 = vmatprep.subr.bf16.mxu0 0
      %375 = vmatpush2.bf16.msra.mxu0 0
      %376 = vmatprep.subr.bf16.mxu0 0
      %377 = vmatpush2.bf16.msra.mxu0 0
      %378 = vmatprep.subr.bf16.mxu0 0
      %379 = vmatpush2.bf16.msra.mxu0 0
      %380 = vmatprep.subr.bf16.mxu0 0
      %381 = vmatpush2.bf16.msra.mxu0 0
      %382 = vmatprep.subr.bf16.mxu0 0
      %383 = vmatpush2.bf16.msra.mxu0 0
      %384 = vmatprep.subr.bf16.mxu0 0
      %385 = vmatpush2.bf16.msra.mxu0 0
      %386 = vmatprep.mubr.bf16.mxu0 0
      %387 = vmatmul.mubr.bf16.gmra.mxu0 %v347
      %v388 = vpop.f32.mrf.mxu0
      %v389 = vadd.f32 %v333, %v388
      %v390 = vpop.f32.mrf.mxu0
      %v391 = vpop.f32.mrf.mxu0
      %v392 = vadd.f32 %v338, %v391
      %v393 = vpop.f32.mrf.mxu0
      %394 = vdwg.mxu0
      %v396 = vshrl.u32 %v172, 16
      %v398 = vrot.slane %v396, 5
      %v399 = vshll.u32 %v172, 16
      %v401 = vrot.slane %v399, 6
      %v402 = vor.u32 %v398, %v401
      %v403 = vrot.slane %v402, 4
      %v405 = vmax.bf16 %v172, %v403
      %v407 = vshrl.u32 %v173, 16
      %v409 = vrot.slane %v407, 5
      %v410 = vshll.u32 %v173, 16
      %v412 = vrot.slane %v410, 6
      %v413 = vor.u32 %v409, %v412
      %v414 = vrot.slane %v409, 4
      %v417 = vmax.bf16 %v172, %v413
      %v418 = vmax.bf16 %v173, %v414
      %vm421 = vcmask 1040384
      %vm422 = vcmask 1044484
      %vm423 = vmor %vm421, %vm422
      %v424 = vrot.slane %v417, 7
      %v425 = vrot.slane %v424, 4
      %v426 = vrot.slane %v418, 7
      %v427 = vsel %vm423, %v425, %v426
      %v429 = vmax.bf16 %v405, %v427
      %v430 = vunpack.c.l.bf16 %v429
      %v432 = vrot.slane %v430, 3
      %v434 = vsel %vm349, %v392, %v432
      %vm435 = vcmask 523264
      %v436 = vsel %vm435, %v389, 0.0
      %437 = vadd.xlane.f32.xlu0 %v436
      %v438 = vpop.xlane.xlu0 %437
      %v439 = vsel %vm435, %v434, 0.0
      %440 = vadd.xlane.f32.xlu0 %v439
      %v441 = vpop.xlane.xlu0 %440
      %v442 = vmul.f32 %v389, %v389
      %v443 = vmul.f32 %v434, %v434
      %v444 = vsel %vm435, %v442, 0.0
      %445 = vadd.xlane.f32.xlu0 %v444
      %v446 = vpop.xlane.xlu0 %445
      %v447 = vsel %vm435, %v443, 0.0
      %448 = vadd.xlane.f32.xlu0 %v447
      %v449 = vpop.xlane.xlu0 %448
      %v450 = vsel %vm243, %v438, %v446
      %v451 = vsel %vm243, %v441, %v449
      %vm452 = vcmask 15360
      %453 = vst.msk [vmem:[%s170] sm:$0xff] %vm452, %v450
      %454 = vst.msk [vmem:[%s170 + $0x8] sm:$0xff] %vm452, %v451
      %p455 = scmp.lt.s32.totalorder %s14, 1
      %s456 = scalar_select %p455, %s14, 1
      %s457 = smul.addr %s456, 2
      %s458 = smul.addr %s457, 8
      %s459 = scalar_lea.vmem %s3, %s458
      // Predicated region
      $region33: #{tpu_custom_call.1} parent=31 // pred_check
        %p460 = pneg %p100
      $region34: #{tpu_custom_call.1} parent=31 // pred_check_branch
        %462 = sbr.rel (%p460) target = $region36
      $region35: #{tpu_custom_call.1} parent=31 // pred_region
        _
      $region36: #{tpu_custom_call.1} parent=31 // pred_fallthru
        _
    $region32: #{tpu_custom_call.1} parent=5 // pred_fallthru
      _
    %p463 = scmp.le.s32.totalorder 2, %s9
    // Predicated region
    $region37: #{tpu_custom_call.1} parent=5 // pred_check
      %p464 = pneg %p463
    $region38: #{tpu_custom_call.1} parent=5 // pred_check_branch
      %466 = sbr.rel (%p464) target = $region40
    $region39: #{tpu_custom_call.1} parent=5 // pred_region
      %s467 = ssub.s32 %s9, 2
      // Predicated region
      $region41: #{tpu_custom_call.1} parent=39 // pred_check
        %p468 = pneg %p106
      $region42: #{tpu_custom_call.1} parent=39 // pred_check_branch
        %470 = sbr.rel (%p468) target = $region44
      $region43: #{tpu_custom_call.1} parent=39 // pred_region
        %p471 = scmp.lt.s32.totalorder %s15, 1
        %s472 = scalar_select %p471, %s15, 1
        %s473 = smul.addr %s472, 2
        %s474 = smul.addr %s473, 8
        %s475 = scalar_lea.vmem %s3, %s474
      $region44: #{tpu_custom_call.1} parent=39 // pred_fallthru
        _
    $region40: #{tpu_custom_call.1} parent=5 // pred_fallthru
      _
  $region6: #{tpu_custom_call.1} parent=0 // loop_footer
    %s13 = sadd.s32 1, %s9
  $region7: #{tpu_custom_call.1} parent=0 // loop_footer_branch
    %8 = sbr.rel target = $region3
  $region8: #{tpu_custom_call.1} parent=0 // loop_exit
    _

</llo_original>
